<compile_context>
chip_gen: v6e
topology: v6e:2x2x1
jax: 0.10.0
libtpu: 0.0.40
codegen_flags: <defaults>
</compile_context>

<pallas_src>
import jax
import jax.numpy as jnp
from jax.experimental import pallas as pl
from jax.experimental.pallas import tpu as pltpu

n_embd = 64
d_model = n_embd
n_hidden = 100
ret = d_model          # output width of the decoder FFN

H_PAD = 128            # n_hidden (100) zero-padded to a full 128-lane width
ROW_TILE = 2048        # row tile for the gridded path (bandwidth-bound sizing)
SMALL_ROWS = 1024      # at or below this, run single-shot (no grid / pipeline)


def _ffn_kernel(x_ref, w1_ref, b1_ref, w2_ref, b2_ref, o_ref):
    # x_ref : (R, D)        f32  (cast to bf16 in-kernel; VPU cast hides under DMA/MXU)
    # w1_ref: (D, H_PAD)    bf16   b1_ref: (1, H_PAD) f32
    # w2_ref: (H_PAD, OUT)  bf16   b2_ref: (1, OUT)   f32
    # o_ref : (R, OUT)      f32  (real output width, no padding)
    xb = x_ref[...].astype(jnp.bfloat16)
    h = jnp.dot(xb, w1_ref[...], preferred_element_type=jnp.float32)
    h = jnp.maximum(h + b1_ref[...], 0.0)          # bias + ReLU in f32
    # Dropout(p=0.2) in eval mode == identity.
    # TODO(synk): training-mode dropout via pltpu.prng_seed / prng_random_bits.
    y = jnp.dot(h.astype(jnp.bfloat16), w2_ref[...],
                preferred_element_type=jnp.float32) + b2_ref[...]
    o_ref[...] = y.astype(o_ref.dtype)


def prepare_params(w1, b1, w2, b2):
    """One-time weight padding / bf16 cast (hoisted out of the per-call path).

    Zero-padding the hidden dim 100 -> 128 is exact: padded W1 columns produce
    h == bias 0 -> ReLU 0, and the matching zero W2 rows contribute nothing.
    """
    d_in, d_hid = w1.shape
    d_out = w2.shape[1]
    w1p = jnp.zeros((d_in, H_PAD), jnp.bfloat16).at[:, :d_hid].set(
        w1.astype(jnp.bfloat16))
    b1p = jnp.zeros((1, H_PAD), jnp.float32).at[:, :d_hid].set(
        b1.reshape(1, -1).astype(jnp.float32))
    w2p = jnp.zeros((H_PAD, d_out), jnp.bfloat16).at[:d_hid, :].set(
        w2.astype(jnp.bfloat16))
    b2p = b2.reshape(1, -1).astype(jnp.float32)
    return w1p, b1p, w2p, b2p


@jax.jit
def feed_forward_decoder(x, w1p, b1p, w2p, b2p):
    """x: (batch, seq, d_model) f32 -> (batch, seq, out_dim) f32."""
    B, S, D = x.shape
    R = B * S
    out_dim = w2p.shape[1]
    x2 = x.reshape(R, D)                       # free view, stays f32
    out_shape = jax.ShapeDtypeStruct((R, out_dim), jnp.float32)

    if R <= SMALL_ROWS:
        # Decode-size case: whole problem (< ~0.6 MiB) is VMEM-resident,
        # kernel body runs exactly once, no pipeline bookkeeping.
        out = pl.pallas_call(
            _ffn_kernel,
            out_shape=out_shape,
            in_specs=[pl.BlockSpec(memory_space=pltpu.MemorySpace.VMEM)] * 5,
            out_specs=pl.BlockSpec(memory_space=pltpu.MemorySpace.VMEM),
        )(x2, w1p, b1p, w2p, b2p)
    else:
        # Gridded path, unconditional for large R: pl.cdiv handles ragged
        # final row block (masked writeback).  Weights use constant index_maps
        # so they stay VMEM-resident across the grid; 'parallel' lets v7x
        # shard the row axis across its two TensorCores.
        out = pl.pallas_call(
            _ffn_kernel,
            out_shape=out_shape,
            grid=(pl.cdiv(R, ROW_TILE),),
            in_specs=[
                pl.BlockSpec((ROW_TILE, D), lambda i: (i, 0)),
                pl.BlockSpec((D, H_PAD), lambda i: (0, 0)),
                pl.BlockSpec((1, H_PAD), lambda i: (0, 0)),
                pl.BlockSpec((H_PAD, out_dim), lambda i: (0, 0)),
                pl.BlockSpec((1, out_dim), lambda i: (0, 0)),
            ],
            out_specs=pl.BlockSpec((ROW_TILE, out_dim), lambda i: (i, 0)),
            compiler_params=pltpu.CompilerParams(
                dimension_semantics=("parallel",),
                vmem_limit_bytes=32 * 1024 * 1024,
            ),
        )(x2, w1p, b1p, w2p, b2p)

    return out.reshape(B, S, out_dim)


def init_params(key, d_in, d_hid, d_out):
    """Deterministic init mimicking nn.Linear (uniform +/- 1/sqrt(fan_in))."""
    k1, k2, k3, k4 = jax.random.split(key, 4)
    bound1 = 1.0 / jnp.sqrt(d_in)
    bound2 = 1.0 / jnp.sqrt(d_hid)
    w1 = jax.random.uniform(k1, (d_in, d_hid), jnp.float32, -bound1, bound1)
    b1 = jax.random.uniform(k2, (1, d_hid), jnp.float32, -bound1, bound1)
    w2 = jax.random.uniform(k3, (d_hid, d_out), jnp.float32, -bound2, bound2)
    b2 = jax.random.uniform(k4, (1, d_out), jnp.float32, -bound2, bound2)
    return w1, b1, w2, b2


if __name__ == "__main__":
    key = jax.random.PRNGKey(0)
    kx, kp, kx2 = jax.random.split(key, 3)

    w1, b1, w2, b2 = init_params(kp, d_model, n_hidden, ret)
    params = prepare_params(w1, b1, w2, b2)

    def ref_fwd(x):
        # Full-f32 PyTorch-semantic forward (eval-mode dropout == identity).
        x2 = x.reshape(-1, d_model)
        h = jnp.maximum(x2 @ w1 + b1, 0.0)
        return (h @ w2 + b2).reshape(*x.shape[:-1], ret)

    # 1) Small (decode-like) case: exercises the no-grid VMEM-resident path.
    batch, seq = 2, 8
    x = jax.random.normal(kx, (batch, seq, d_model), dtype=jnp.float32)
    y = jax.block_until_ready(feed_forward_decoder(x, *params))
    assert y.shape == (batch, seq, ret)
    # Tolerance covers bf16 MXU-operand rounding (accumulation is f32).
    assert jnp.allclose(y, ref_fwd(x), atol=5e-2, rtol=5e-2)

    # 2) Larger case: exercises the gridded, pipelined path including the
    #    ragged final row block handled by the pl.cdiv-based grid.
    batch2, seq2 = 4, 600          # R = 2400 -> 2 grid steps of ROW_TILE=2048
    xb = jax.random.normal(kx2, (batch2, seq2, d_model), dtype=jnp.float32)
    yb = jax.block_until_ready(feed_forward_decoder(xb, *params))
    assert yb.shape == (batch2, seq2, ret)
    assert jnp.allclose(yb, ref_fwd(xb), atol=5e-2, rtol=5e-2)

    print("KERNEL_OK")
</pallas_src>

<mosaic_0001>
module attributes {stable_mosaic.version = 11 : i64} {
  func.func @_ffn_kernel(%arg0: memref<16x64xf32, #tpu.memory_space<vmem>>, %arg1: memref<64x128xbf16, #tpu.memory_space<vmem>>, %arg2: memref<1x128xf32, #tpu.memory_space<vmem>>, %arg3: memref<128x64xbf16, #tpu.memory_space<vmem>>, %arg4: memref<1x64xf32, #tpu.memory_space<vmem>>, %arg5: memref<16x64xf32, #tpu.memory_space<vmem>>) attributes {dimension_semantics = [], scalar_prefetch = 0 : i64, scratch_operands = 0 : i64, tpu.core_type = #tpu.core_type<tc>} {
    %c0 = arith.constant 0 : index
    %c0_0 = arith.constant 0 : index
    %0 = vector.load %arg0[%c0, %c0_0] : memref<16x64xf32, #tpu.memory_space<vmem>>, vector<16x64xf32>
    %1 = arith.truncf %0 : vector<16x64xf32> to vector<16x64xbf16>
    %c0_1 = arith.constant 0 : index
    %c0_2 = arith.constant 0 : index
    %2 = vector.load %arg1[%c0_1, %c0_2] : memref<64x128xbf16, #tpu.memory_space<vmem>>, vector<64x128xbf16>
    %cst = arith.constant dense<0.000000e+00> : vector<16x128xf32>
    %3 = tpu.matmul %1, %2, %cst {dimension_numbers = #tpu.dot_dimension_numbers<[1], [0], [0], [1], [0, 0, 1, 1], [], []>} : vector<16x64xbf16>, vector<64x128xbf16>, vector<16x128xf32> -> vector<16x128xf32>
    %c0_3 = arith.constant 0 : index
    %c0_4 = arith.constant 0 : index
    %4 = vector.load %arg2[%c0_3, %c0_4] : memref<1x128xf32, #tpu.memory_space<vmem>>, vector<1x128xf32>
    %5 = vector.broadcast %4 : vector<1x128xf32> to vector<16x128xf32>
    %6 = arith.addf %3, %5 : vector<16x128xf32>
    %cst_5 = arith.constant 0.000000e+00 : f32
    %7 = vector.broadcast %cst_5 : f32 to vector<16x128xf32>
    %8 = arith.maximumf %6, %7 : vector<16x128xf32>
    %9 = arith.truncf %8 : vector<16x128xf32> to vector<16x128xbf16>
    %c0_6 = arith.constant 0 : index
    %c0_7 = arith.constant 0 : index
    %10 = vector.load %arg3[%c0_6, %c0_7] : memref<128x64xbf16, #tpu.memory_space<vmem>>, vector<128x64xbf16>
    %cst_8 = arith.constant dense<0.000000e+00> : vector<16x64xf32>
    %11 = tpu.matmul %9, %10, %cst_8 {dimension_numbers = #tpu.dot_dimension_numbers<[1], [0], [0], [1], [0, 0, 1, 1], [], []>} : vector<16x128xbf16>, vector<128x64xbf16>, vector<16x64xf32> -> vector<16x64xf32>
    %c0_9 = arith.constant 0 : index
    %c0_10 = arith.constant 0 : index
    %12 = vector.load %arg4[%c0_9, %c0_10] : memref<1x64xf32, #tpu.memory_space<vmem>>, vector<1x64xf32>
    %13 = vector.broadcast %12 : vector<1x64xf32> to vector<16x64xf32>
    %14 = arith.addf %11, %13 : vector<16x64xf32>
    %c0_11 = arith.constant 0 : index
    %c0_12 = arith.constant 0 : index
    %15 = vector.load %arg5[%c0_11, %c0_12] : memref<16x64xf32, #tpu.memory_space<vmem>>, vector<16x64xf32>
    tpu.vector_store %arg5[%c0_11, %c0_12], %14 {strides = array<i32>} : memref<16x64xf32, #tpu.memory_space<vmem>>, vector<16x64xf32>,
    return
  }
}

</mosaic_0001>

<llo_original>
// kernel: feed_forward_decoder.1
$region0: #{feed_forward_decoder.1}
  #allocation0 [shape = 'u32[]', space=smem, size = 0x4, offset = 0x4, fixed_abs, tag = 'smem constant byte address 0x4 - core index']
  #allocation1 [shape = 'u32[144,128]{1,0:T(1,128)}', space=vmem, size = 0x12000, scoped, tag = 'internal scratch']
  %s0 = inlined_call_operand.vmem [shape: f32[16,64], index: 0, kind: input, shape index: {}]
  %s1 = inlined_call_operand.vmem [shape: bf16[64,128], index: 1, kind: input, shape index: {}]
  %s2 = inlined_call_operand.vmem [shape: f32[1,128], index: 2, kind: input, shape index: {}]
  %s3 = inlined_call_operand.vmem [shape: bf16[128,64], index: 3, kind: input, shape index: {}]
  %s4 = inlined_call_operand.vmem [shape: f32[1,64], index: 4, kind: input, shape index: {}]
  %s5 = inlined_call_operand.hbm [shape: f32[16,64], index: 5, kind: output, shape index: {}]
  %s6 = sld [smem:[#allocation0]]
  $region30: #{feed_forward_decoder.1} parent=0
    _
  %s8 = ssub.s32 1, %s6
  %s9 = scalar_select 0, %s8, %s6
  $region1: #{feed_forward_decoder.1} parent=0
    #allocation2 [shape = 'u8[8192]{0}', space=vmem, size = 0x2000, scoped, tag = 'output window, operand 0, single buffered']
    #allocation3 [shape = 's32[1]{0}', space=sflag, size = 0x4, scoped, tag = 'scoped memory for feed_forward_decoder.1']
    %10 = vsyncpa [#allocation3], 0
    // Predicated region
    $region2: #{feed_forward_decoder.1} parent=1 // pred_check
      _
    $region3: #{feed_forward_decoder.1} parent=1 // pred_check_branch
      %12 = sbr.rel (0) target = $region5
    $region4: #{feed_forward_decoder.1} parent=1 // pred_region
      _
    $region5: #{feed_forward_decoder.1} parent=1 // pred_fallthru
      _
    // Predicated region
    $region6: #{feed_forward_decoder.1} parent=1 // pred_check
      _
    $region7: #{feed_forward_decoder.1} parent=1 // pred_check_branch
      %14 = sbr.rel (0) target = $region9
    $region8: #{feed_forward_decoder.1} parent=1 // pred_region
      _
    $region9: #{feed_forward_decoder.1} parent=1 // pred_fallthru
      _
    // Predicated region
    $region10: #{feed_forward_decoder.1} parent=1 // pred_check
      _
    $region11: #{feed_forward_decoder.1} parent=1 // pred_check_branch
      %16 = sbr.rel (0) target = $region13
    $region12: #{feed_forward_decoder.1} parent=1 // pred_region
      _
    $region13: #{feed_forward_decoder.1} parent=1 // pred_fallthru
      _
    // Predicated region
    $region14: #{feed_forward_decoder.1} parent=1 // pred_check
      _
    $region15: #{feed_forward_decoder.1} parent=1 // pred_check_branch
      %18 = sbr.rel (0) target = $region17
    $region16: #{feed_forward_decoder.1} parent=1 // pred_region
      _
    $region17: #{feed_forward_decoder.1} parent=1 // pred_fallthru
      _
    // Predicated region
    $region18: #{feed_forward_decoder.1} parent=1 // pred_check
      _
    $region19: #{feed_forward_decoder.1} parent=1 // pred_check_branch
      %20 = sbr.rel (0) target = $region21
    $region20: #{feed_forward_decoder.1} parent=1 // pred_region
      _
    $region21: #{feed_forward_decoder.1} parent=1 // pred_fallthru
      _
    %v22 = vld [vmem:[%s0] sm:$0xff]
    %v23 = vld [vmem:[%s0 + $0x8] sm:$0xff]
    %v24 = vpack.c.bf16 %v23, %v22
    %v25 = vld [vmem:[%s1] sm:$0xf]
    %v26 = vld [vmem:[%s1 + $0x4] sm:$0xf]
    %v27 = vld [vmem:[%s1 + $0x8] sm:$0xf]
    %v28 = vld [vmem:[%s1 + $0xc] sm:$0xf]
    %v29 = vld [vmem:[%s1 + $0x10] sm:$0xf]
    %v30 = vld [vmem:[%s1 + $0x14] sm:$0xf]
    %v31 = vld [vmem:[%s1 + $0x18] sm:$0xf]
    %v32 = vld [vmem:[%s1 + $0x1c] sm:$0xf]
    %v33 = vld [vmem:[%s2] sm:$0x1]
    %v35 = vlaneseq
    %v36 = vshrl.u32 %v35, 7
    %v37 = vsub.s32 0, %v36
    %v38 = vrot.slane %v33, %v37
    %v48 = vunpack.c.l.b16 %v25
    %v49 = vunpack.c.l.b16 %v26
    %v50 = vunpack.c.l.b16 %v27
    %v51 = vunpack.c.l.b16 %v28
    %v52 = vunpack.c.l.b16 %v29
    %v53 = vunpack.c.l.b16 %v30
    %v54 = vunpack.c.l.b16 %v31
    %v55 = vunpack.c.l.b16 %v32
    %v56 = vpack.c.b16 %v49, %v48
    %v57 = vpack.c.b16 %v51, %v50
    %v58 = vpack.c.b16 %v53, %v52
    %v59 = vpack.c.b16 %v55, %v54
    %vm64 = vcmask 523264
    %v66 = vsel %vm64, %v24, 0
    %68 = vmatprep.subr.bf16.mxu0 0
    %69 = vmatpush1.bf16.msra.mxu0 0
    %70 = vmatprep.subr.bf16.mxu0 0
    %71 = vmatpush1.bf16.msra.mxu0 0
    %72 = vmatprep.subr.bf16.mxu0 0
    %73 = vmatpush1.bf16.msra.mxu0 0
    %74 = vmatprep.subr.bf16.mxu0 0
    %75 = vmatpush1.bf16.msra.mxu0 0
    %76 = vmatprep.subr.bf16.mxu0 0
    %77 = vmatpush1.bf16.msra.mxu0 %v59
    %78 = vmatprep.subr.bf16.mxu0 0
    %79 = vmatpush1.bf16.msra.mxu0 %v58
    %80 = vmatprep.subr.bf16.mxu0 0
    %81 = vmatpush1.bf16.msra.mxu0 %v57
    %82 = vmatprep.subr.bf16.mxu0 0
    %83 = vmatpush1.bf16.msra.mxu0 %v56
    %84 = vmatprep.subr.bf16.mxu0 0
    %85 = vmatpush2.bf16.msra.mxu0 0
    %86 = vmatprep.subr.bf16.mxu0 0
    %87 = vmatpush2.bf16.msra.mxu0 0
    %88 = vmatprep.subr.bf16.mxu0 0
    %89 = vmatpush2.bf16.msra.mxu0 0
    %90 = vmatprep.subr.bf16.mxu0 0
    %91 = vmatpush2.bf16.msra.mxu0 0
    %92 = vmatprep.subr.bf16.mxu0 0
    %93 = vmatpush2.bf16.msra.mxu0 0
    %94 = vmatprep.subr.bf16.mxu0 0
    %95 = vmatpush2.bf16.msra.mxu0 0
    %96 = vmatprep.subr.bf16.mxu0 0
    %97 = vmatpush2.bf16.msra.mxu0 0
    %98 = vmatprep.subr.bf16.mxu0 0
    %99 = vmatpush2.bf16.msra.mxu0 0
    %100 = vmatprep.mubr.bf16.mxu0 0
    %101 = vmatmul.mubr.bf16.gmra.mxu0 %v66
    %v102 = vpop.f32.mrf.mxu0
    %v103 = vadd.f32 %v38, %v102
    %v104 = vpop.f32.mrf.mxu0
    %v105 = vpop.f32.mrf.mxu0
    %v106 = vadd.f32 %v38, %v105
    %v107 = vpop.f32.mrf.mxu0
    %108 = vdwg.mxu0
    %v109 = vmax.f32 %v103, 0.0
    %v110 = vmax.f32 %v106, 0.0
    %v111 = vpack.c.bf16 %v110, %v109
    %v112 = vld [vmem:[%s3] sm:$0xf]
    %v113 = vld [vmem:[%s3 + $0x4] sm:$0xf]
    %v114 = vld [vmem:[%s3 + $0x8] sm:$0xf]
    %v115 = vld [vmem:[%s3 + $0xc] sm:$0xf]
    %v116 = vld [vmem:[%s3 + $0x10] sm:$0xf]
    %v117 = vld [vmem:[%s3 + $0x14] sm:$0xf]
    %v118 = vld [vmem:[%s3 + $0x18] sm:$0xf]
    %v119 = vld [vmem:[%s3 + $0x1c] sm:$0xf]
    %v120 = vld [vmem:[%s3 + $0x20] sm:$0xf]
    %v121 = vld [vmem:[%s3 + $0x24] sm:$0xf]
    %v122 = vld [vmem:[%s3 + $0x28] sm:$0xf]
    %v123 = vld [vmem:[%s3 + $0x2c] sm:$0xf]
    %v124 = vld [vmem:[%s3 + $0x30] sm:$0xf]
    %v125 = vld [vmem:[%s3 + $0x34] sm:$0xf]
    %v126 = vld [vmem:[%s3 + $0x38] sm:$0xf]
    %v127 = vld [vmem:[%s3 + $0x3c] sm:$0xf]
    %v128 = vld [vmem:[%s4] sm:$0x1]
    %v130 = vlaneseq
    %v131 = vshrl.u32 %v130, 7
    %v132 = vsub.s32 0, %v131
    %v133 = vrot.slane %v128, %v132
    %v151 = vunpack.c.l.b16 %v112
    %v152 = vunpack.c.l.b16 %v113
    %v153 = vunpack.c.l.b16 %v114
    %v154 = vunpack.c.l.b16 %v115
    %v155 = vunpack.c.l.b16 %v116
    %v156 = vunpack.c.l.b16 %v117
    %v157 = vunpack.c.l.b16 %v118
    %v158 = vunpack.c.l.b16 %v119
    %v159 = vunpack.c.l.b16 %v120
    %v160 = vunpack.c.l.b16 %v121
    %v161 = vunpack.c.l.b16 %v122
    %v162 = vunpack.c.l.b16 %v123
    %v163 = vunpack.c.l.b16 %v124
    %v164 = vunpack.c.l.b16 %v125
    %v165 = vunpack.c.l.b16 %v126
    %v166 = vunpack.c.l.b16 %v127
    %v167 = vpack.c.b16 %v152, %v151
    %v168 = vpack.c.b16 %v154, %v153
    %v169 = vpack.c.b16 %v156, %v155
    %v170 = vpack.c.b16 %v158, %v157
    %v171 = vpack.c.b16 %v160, %v159
    %v172 = vpack.c.b16 %v162, %v161
    %v173 = vpack.c.b16 %v164, %v163
    %v174 = vpack.c.b16 %v166, %v165
    %183 = vmatprep.subr.bf16.mxu0 0
    %184 = vmatpush1.bf16.msra.mxu0 %v174
    %185 = vmatprep.subr.bf16.mxu0 0
    %186 = vmatpush1.bf16.msra.mxu0 %v173
    %187 = vmatprep.subr.bf16.mxu0 0
    %188 = vmatpush1.bf16.msra.mxu0 %v172
    %189 = vmatprep.subr.bf16.mxu0 0
    %190 = vmatpush1.bf16.msra.mxu0 %v171
    %191 = vmatprep.subr.bf16.mxu0 0
    %192 = vmatpush1.bf16.msra.mxu0 %v170
    %193 = vmatprep.subr.bf16.mxu0 0
    %194 = vmatpush1.bf16.msra.mxu0 %v169
    %195 = vmatprep.subr.bf16.mxu0 0
    %196 = vmatpush1.bf16.msra.mxu0 %v168
    %197 = vmatprep.subr.bf16.mxu0 0
    %198 = vmatpush1.bf16.msra.mxu0 %v167
    %199 = vmatprep.subr.bf16.mxu0 0
    %200 = vmatpush2.bf16.msra.mxu0 0
    %201 = vmatprep.subr.bf16.mxu0 0
    %202 = vmatpush2.bf16.msra.mxu0 0
    %203 = vmatprep.subr.bf16.mxu0 0
    %204 = vmatpush2.bf16.msra.mxu0 0
    %205 = vmatprep.subr.bf16.mxu0 0
    %206 = vmatpush2.bf16.msra.mxu0 0
    %207 = vmatprep.subr.bf16.mxu0 0
    %208 = vmatpush2.bf16.msra.mxu0 0
    %209 = vmatprep.subr.bf16.mxu0 0
    %210 = vmatpush2.bf16.msra.mxu0 0
    %211 = vmatprep.subr.bf16.mxu0 0
    %212 = vmatpush2.bf16.msra.mxu0 0
    %213 = vmatprep.subr.bf16.mxu0 0
    %214 = vmatpush2.bf16.msra.mxu0 0
    %215 = vmatprep.mubr.bf16.mxu0 0
    %216 = vmatmul.mubr.bf16.gmra.mxu0 %v111
    %v217 = vpop.f32.mrf.mxu0
    %v218 = vadd.f32 %v133, %v217
    %v219 = vpop.f32.mrf.mxu0
    %v220 = vpop.f32.mrf.mxu0
    %v221 = vadd.f32 %v133, %v220
    %v222 = vpop.f32.mrf.mxu0
    %223 = vdwg.mxu0
    %224 = vst.msk [vmem:[#allocation2] sm:$0xff] %vm64, %v218
    %225 = vst.msk [vmem:[#allocation2 + $0x8] sm:$0xff] %vm64, %v221
    // Predicated region
    $region22: #{feed_forward_decoder.1} parent=1 // pred_check
      _
    $region23: #{feed_forward_decoder.1} parent=1 // pred_check_branch
      %227 = sbr.rel (0) target = $region25
    $region24: #{feed_forward_decoder.1} parent=1 // pred_region
      %s229 = ssub.s32 256, 256
      %230 = vsyncadd [#allocation3], %s229
      %s231 = sshll.u32 [#allocation2], 4
      %s232 = int_to_ptr.vmem [resolvable:$true] %s231
      %237 = dma.vmem_to_hbm [thread:$0]  %s232, 256, %s5, [#allocation3], 128, 128, 8
    $region25: #{feed_forward_decoder.1} parent=1 // pred_fallthru
      _
    // Predicated region
    $region26: #{feed_forward_decoder.1} parent=1 // pred_check
      _
    $region27: #{feed_forward_decoder.1} parent=1 // pred_check_branch
      %239 = sbr.rel (0) target = $region29
    $region28: #{feed_forward_decoder.1} parent=1 // pred_region
      %240 = dma.done [#allocation3], 256
    $region29: #{feed_forward_decoder.1} parent=1 // pred_fallthru
      _
    %241 = vsyncpa [#allocation3], 1

</llo_original>
